<compile_context>
chip_gen: v5e
topology: v5e:2x2
jax: 0.10.0
libtpu: 0.0.40
codegen_flags: <defaults>
</compile_context>

<pallas_src>
import jax
import jax.numpy as jnp
from jax.experimental import pallas as pl
from jax.experimental.pallas import tpu as pltpu


_SMALL_FALLBACK_BYTES = 256 * 1024     # below this, XLA concat already wins
_NARROW_ROW_BYTES = 512                # pre-merge inputs skinnier than this
_LANE = 128


def _sublane_pack(dtype) -> int:
    """Rows per sublane pack for this dtype (8 f32, 16 bf16, 32 int8)."""
    itemsize = jnp.dtype(dtype).itemsize
    return max(8, 32 // max(itemsize, 1))


def _vmem_budget():
    """(working-set budget, vmem_limit_bytes), derived from the chip generation."""
    cap = None
    try:
        cap = int(getattr(pltpu.get_tpu_info(), "vmem_capacity_bytes"))
    except Exception:
        cap = None
    if cap is not None and cap >= 100 * 1024 * 1024:
        # v5e / v6e: 128 MiB physical VMEM -> large double-buffered blocks.
        return 48 * 1024 * 1024, 96 * 1024 * 1024
    # v7x (64 MiB physical VMEM) or unknown generation: stay conservative.
    return 28 * 1024 * 1024, 48 * 1024 * 1024


# ---------------------------------------------------------------------------
# Fast path: grid-less HBM -> HBM DMA concat (no VMEM staging at all).
# ---------------------------------------------------------------------------
def _flat_dma_kernel(*refs):
    """Issue one async copy per input into its static column range of the
    output, all concurrently, then wait for all of them."""
    *in_refs, o_ref, sem = refs
    copies = []
    off = 0
    for i, r in enumerate(in_refs):
        f = r.shape[-1]
        cp = pltpu.make_async_copy(r, o_ref.at[:, off:off + f], sem.at[i])
        cp.start()
        copies.append(cp)
        off += f
    for cp in copies:
        cp.wait()


def _dma_concat_rows(flats, n, f_total, dtype):
    k = len(flats)
    return pl.pallas_call(
        _flat_dma_kernel,
        out_shape=jax.ShapeDtypeStruct((n, f_total), dtype),
        in_specs=[pl.BlockSpec(memory_space=pl.ANY) for _ in range(k)],
        out_specs=pl.BlockSpec(memory_space=pl.ANY),
        scratch_shapes=[pltpu.SemaphoreType.DMA((k,))],
    )(*flats)


# ---------------------------------------------------------------------------
# General path: VMEM-staged copy, blocked over the batch dimension.
# ---------------------------------------------------------------------------
def _flat_copy_kernel(*refs):
    """Copy each (TB, F_i) input tile into its static column range of the
    (TB, F_total) output tile, casting to the output dtype in-register."""
    *in_refs, o_ref = refs
    off = 0
    for r in in_refs:
        f = r.shape[-1]
        o_ref[:, off:off + f] = r[...].astype(o_ref.dtype)
        off += f


def _staged_concat_rows(flats, n, feat_sizes, f_total, out_dtype):
    out_isz = jnp.dtype(out_dtype).itemsize
    in_row_bytes = sum(fi * jnp.dtype(f.dtype).itemsize
                       for fi, f in zip(feat_sizes, flats))
    # Per-row bytes of the working set: double-buffered inputs + output.
    bytes_per_row = 2 * in_row_bytes + 2 * f_total * out_isz
    budget, limit_cap = _vmem_budget()

    pack = max([_sublane_pack(out_dtype)] + [_sublane_pack(f.dtype) for f in flats])
    if n <= pack:
        tb = n  # block covers the full batch dim (satisfies the (8,128) rule)
    else:
        tb = max(budget // max(bytes_per_row, 1), pack)   # bytes-based sizing
        tb = max((tb // pack) * pack, pack)
        tb = min(tb, (n // pack) * pack)

    footprint = tb * bytes_per_row
    if footprint > budget and tb > pack:
        tb = pack
        footprint = tb * bytes_per_row
    if footprint > budget:
        # TODO(synk): feature-tiled (column-blocked) grid for extremely wide,
        # unaligned rows instead of falling back to XLA concat here.
        return None

    grid = (pl.cdiv(n, tb),)
    in_specs = [pl.BlockSpec((tb, fi), lambda b: (b, 0)) for fi in feat_sizes]
    out_spec = pl.BlockSpec((tb, f_total), lambda b: (b, 0))
    vmem_limit = int(min(limit_cap,
                         max(footprint + 4 * 1024 * 1024, 16 * 1024 * 1024)))

    return pl.pallas_call(
        _flat_copy_kernel,
        out_shape=jax.ShapeDtypeStruct((n, f_total), out_dtype),
        grid=grid,
        in_specs=in_specs,
        out_specs=out_spec,
        compiler_params=pltpu.CompilerParams(
            dimension_semantics=("parallel",),
            vmem_limit_bytes=vmem_limit,
        ),
    )(*flats)


# ---------------------------------------------------------------------------
# Wrapper (equivalent of Flat.forward).
# ---------------------------------------------------------------------------
def _merge_narrow_inputs(flats, out_dtype):
    """Merge consecutive very-skinny inputs with a cheap XLA concat so they do
    not drag the DMA efficiency of the main kernel down."""
    merged, pending = [], []

    def flush():
        if not pending:
            return
        if len(pending) == 1:
            merged.append(pending[0])
        else:
            merged.append(jnp.concatenate(
                [p.astype(out_dtype) for p in pending], axis=1))
        pending.clear()

    for f in flats:
        if f.shape[1] * jnp.dtype(f.dtype).itemsize < _NARROW_ROW_BYTES:
            pending.append(f)
        else:
            flush()
            merged.append(f)
    flush()
    return merged


def flat_forward(x):
    """Pallas/JAX equivalent of Flat.forward.

    x: a jnp array of shape (N, ...) or a list/tuple of such arrays
       (concatenated along dim 1, like torch.cat(x, 1)).
    returns: (N, total_features) array.
    """
    xs = list(x) if isinstance(x, (list, tuple)) else [x]
    if not xs:
        raise ValueError("Flat.forward received an empty list")
    n = xs[0].shape[0]

    # Single tensor: view(N, -1) is a free metadata reshape -> no kernel.
    if len(xs) == 1:
        return jnp.reshape(xs[0], (n, -1))

    out_dtype = jnp.result_type(*xs)
    # Keep native dtypes here: any needed cast happens inside the kernel.
    flats = [jnp.reshape(xi, (n, -1)) for xi in xs]
    f_total = sum(int(f.shape[1]) for f in flats)

    out_bytes = n * f_total * jnp.dtype(out_dtype).itemsize
    if out_bytes < _SMALL_FALLBACK_BYTES:
        # Tiny problem: XLA's native concat is already optimal.
        return jnp.concatenate([f.astype(out_dtype) for f in flats], axis=1)

    flats = _merge_narrow_inputs(flats, out_dtype)
    feat_sizes = [int(f.shape[1]) for f in flats]
    if len(flats) == 1:
        return flats[0].astype(out_dtype)

    # Fast path: homogeneous dtype and lane-tile-aligned column ranges ->
    # pure HBM->HBM DMA with no VMEM staging and no grid.
    if (all(f.dtype == out_dtype for f in flats)
            and all(fi % _LANE == 0 for fi in feat_sizes)):
        return _dma_concat_rows(flats, n, f_total, out_dtype)

    out = _staged_concat_rows(flats, n, feat_sizes, f_total, out_dtype)
    if out is None:
        return jnp.concatenate([f.astype(out_dtype) for f in flats], axis=1)
    return out


if __name__ == "__main__":
    key = jax.random.PRNGKey(0)
    keys = jax.random.split(key, 12)

    # 1) Single tensor: pure reshape path (no kernel).
    x = jax.random.normal(keys[0], (2, 4, 16, 16), dtype=jnp.float32)
    out = flat_forward(x)
    jax.block_until_ready(out)
    assert out.shape == (2, 4 * 16 * 16)
    assert bool(jnp.array_equal(out, jnp.reshape(x, (2, -1))))

    # 2) Small list: XLA small-problem fallback path.
    a = jax.random.normal(keys[1], (2, 3, 8, 8), dtype=jnp.float32)
    b = jax.random.normal(keys[2], (2, 5, 8, 8), dtype=jnp.float32)
    out2 = flat_forward([a, b])
    jax.block_until_ready(out2)
    ref2 = jnp.reshape(jnp.concatenate([a, b], axis=1), (2, -1))
    assert bool(jnp.array_equal(out2, ref2))

    # 3) DMA fast path: same dtype, 128-aligned widths (2048 & 1024).
    a3 = jax.random.normal(keys[3], (32, 8, 16, 16), dtype=jnp.float32)
    b3 = jax.random.normal(keys[4], (32, 4, 16, 16), dtype=jnp.float32)
    out3 = flat_forward([a3, b3])
    jax.block_until_ready(out3)
    ref3 = jnp.reshape(jnp.concatenate([a3, b3], axis=1), (32, -1))
    assert out3.shape == (32, (8 + 4) * 16 * 16)
    assert bool(jnp.array_equal(out3, ref3))

    # 4) Staged kernel path: non-128-aligned widths (300 & 500).
    a4 = jax.random.normal(keys[5], (128, 3, 10, 10), dtype=jnp.float32)
    b4 = jax.random.normal(keys[6], (128, 5, 10, 10), dtype=jnp.float32)
    out4 = flat_forward([a4, b4])
    jax.block_until_ready(out4)
    ref4 = jnp.reshape(jnp.concatenate([a4, b4], axis=1), (128, -1))
    assert bool(jnp.array_equal(out4, ref4))

    # 5) Staged kernel path: mixed dtype (in-kernel bf16->f32 cast) and a
    #    partial trailing batch block (n=20, tb=16).
    a5 = jax.random.normal(keys[7], (20, 16, 16, 16), dtype=jnp.float32)
    b5 = jax.random.normal(keys[8], (20, 8, 16, 16), dtype=jnp.bfloat16)
    out5 = flat_forward([a5, b5])
    jax.block_until_ready(out5)
    ref5 = jnp.concatenate([jnp.reshape(a5, (20, -1)),
                            jnp.reshape(b5, (20, -1)).astype(jnp.float32)], axis=1)
    assert out5.dtype == jnp.float32
    assert bool(jnp.array_equal(out5, ref5))

    # 6) Narrow-input pre-merge (widths 1024, 16, 32 -> 1024, 48) + staged path.
    a6 = jax.random.normal(keys[9], (64, 64, 4, 4), dtype=jnp.float32)
    b6 = jax.random.normal(keys[10], (64, 1, 4, 4), dtype=jnp.float32)
    c6 = jax.random.normal(keys[11], (64, 2, 4, 4), dtype=jnp.float32)
    out6 = flat_forward([a6, b6, c6])
    jax.block_until_ready(out6)
    ref6 = jnp.reshape(jnp.concatenate([a6, b6, c6], axis=1), (64, -1))
    assert bool(jnp.array_equal(out6, ref6))

    print("KERNEL_OK")
</pallas_src>

<mosaic_0001>
module attributes {stable_mosaic.version = 11 : i64} {
  func.func @_flat_dma_kernel(%arg0: memref<32x2048xf32, #tpu.memory_space<any>>, %arg1: memref<32x1024xf32, #tpu.memory_space<any>>, %arg2: memref<32x3072xf32, #tpu.memory_space<any>>, %arg3: memref<2x!tpu.dma_semaphore, #tpu.memory_space<semaphore_mem>>) attributes {dimension_semantics = [], scalar_prefetch = 0 : i64, scratch_operands = 1 : i64, tpu.core_type = #tpu.core_type<tc>} {
    %c0_i32 = arith.constant 0 : i32
    %c0_i32_0 = arith.constant 0 : i32
    %c0_i32_1 = arith.constant 0 : i32
    %0 = tpu.memref_slice %arg2[%c0_i32_0, %c0_i32_1] : memref<32x3072xf32, #tpu.memory_space<any>> -> memref<32x2048xf32, #tpu.memory_space<any>>
    %1 = tpu.memref_slice %arg3[%c0_i32] : memref<2x!tpu.dma_semaphore, #tpu.memory_space<semaphore_mem>> -> memref<1x!tpu.dma_semaphore, #tpu.memory_space<semaphore_mem>>
    %2 = tpu.memref_squeeze %1 : memref<1x!tpu.dma_semaphore, #tpu.memory_space<semaphore_mem>> -> memref<!tpu.dma_semaphore, #tpu.memory_space<semaphore_mem>>
    tpu.enqueue_dma source(%arg0 : memref<32x2048xf32, #tpu.memory_space<any>>) target(%0 : memref<32x2048xf32, #tpu.memory_space<any>>) target_semaphore(%2 : memref<!tpu.dma_semaphore, #tpu.memory_space<semaphore_mem>>)
    %c1_i32 = arith.constant 1 : i32
    %c0_i32_2 = arith.constant 0 : i32
    %c2048_i32 = arith.constant 2048 : i32
    %3 = tpu.memref_slice %arg2[%c0_i32_2, %c2048_i32] : memref<32x3072xf32, #tpu.memory_space<any>> -> memref<32x1024xf32, #tpu.memory_space<any>>
    %4 = tpu.memref_slice %arg3[%c1_i32] : memref<2x!tpu.dma_semaphore, #tpu.memory_space<semaphore_mem>> -> memref<1x!tpu.dma_semaphore, #tpu.memory_space<semaphore_mem>>
    %5 = tpu.memref_squeeze %4 : memref<1x!tpu.dma_semaphore, #tpu.memory_space<semaphore_mem>> -> memref<!tpu.dma_semaphore, #tpu.memory_space<semaphore_mem>>
    tpu.enqueue_dma source(%arg1 : memref<32x1024xf32, #tpu.memory_space<any>>) target(%3 : memref<32x1024xf32, #tpu.memory_space<any>>) target_semaphore(%5 : memref<!tpu.dma_semaphore, #tpu.memory_space<semaphore_mem>>)
    %c0_i32_3 = arith.constant 0 : i32
    %c0_i32_4 = arith.constant 0 : i32
    %c0_i32_5 = arith.constant 0 : i32
    %6 = tpu.memref_slice %arg2[%c0_i32_4, %c0_i32_5] : memref<32x3072xf32, #tpu.memory_space<any>> -> memref<32x2048xf32, #tpu.memory_space<any>>
    %7 = tpu.memref_slice %arg3[%c0_i32_3] : memref<2x!tpu.dma_semaphore, #tpu.memory_space<semaphore_mem>> -> memref<1x!tpu.dma_semaphore, #tpu.memory_space<semaphore_mem>>
    %8 = tpu.memref_squeeze %7 : memref<1x!tpu.dma_semaphore, #tpu.memory_space<semaphore_mem>> -> memref<!tpu.dma_semaphore, #tpu.memory_space<semaphore_mem>>
    tpu.wait_dma2 semaphore(%8 : memref<!tpu.dma_semaphore, #tpu.memory_space<semaphore_mem>>) src(%arg0 : memref<32x2048xf32, #tpu.memory_space<any>>) dst(%6 : memref<32x2048xf32, #tpu.memory_space<any>>)
    %c1_i32_6 = arith.constant 1 : i32
    %c0_i32_7 = arith.constant 0 : i32
    %c2048_i32_8 = arith.constant 2048 : i32
    %9 = tpu.memref_slice %arg2[%c0_i32_7, %c2048_i32_8] : memref<32x3072xf32, #tpu.memory_space<any>> -> memref<32x1024xf32, #tpu.memory_space<any>>
    %10 = tpu.memref_slice %arg3[%c1_i32_6] : memref<2x!tpu.dma_semaphore, #tpu.memory_space<semaphore_mem>> -> memref<1x!tpu.dma_semaphore, #tpu.memory_space<semaphore_mem>>
    %11 = tpu.memref_squeeze %10 : memref<1x!tpu.dma_semaphore, #tpu.memory_space<semaphore_mem>> -> memref<!tpu.dma_semaphore, #tpu.memory_space<semaphore_mem>>
    tpu.wait_dma2 semaphore(%11 : memref<!tpu.dma_semaphore, #tpu.memory_space<semaphore_mem>>) src(%arg1 : memref<32x1024xf32, #tpu.memory_space<any>>) dst(%9 : memref<32x1024xf32, #tpu.memory_space<any>>)
    return
  }
}

</mosaic_0001>

<llo_original>
// kernel: tpu_custom_call.1
$region0: #{tpu_custom_call.1}
  #allocation0 [shape = 'u32[]', space=smem, size = 0x4, offset = 0x4, fixed_abs, tag = 'smem constant byte address 0x4 - core index']
  #allocation1 [shape = 'u32[72,128]{1,0:T(1,128)}', space=vmem, size = 0x9000, scoped, tag = 'internal scratch']
  #allocation2 [shape = 's32[2]{0}', space=sflag, size = 0x8, scoped, tag = 'scratch operand']
  #allocation3 [shape = 's32[]', space=sflag, size = 0x4, offset = 0, fixed_abs, tag = 'sflag constant byte address 0x0 - dummy sync flag']
  #allocation5 [shape = 's32[]', space=sflag, size = 0x4, offset = 0, fixed_abs, tag = 'sflag constant byte address 0x0 - dummy sync flag']
  %s0 = inlined_call_operand.hbm [shape: f32[32,2048], index: 0, kind: input, shape index: {}]
  %s1 = inlined_call_operand.hbm [shape: f32[32,1024], index: 1, kind: input, shape index: {}]
  %s2 = inlined_call_operand.hbm [shape: f32[32,3072], index: 2, kind: output, shape index: {}]
  %s3 = sld [smem:[#allocation0]]
  $region2: #{tpu_custom_call.1} parent=0
    _
  %s5 = ssub.s32 1, %s3
  %s6 = scalar_select 0, %s5, %s3
  $region1: #{tpu_custom_call.1} parent=0
    #allocation4 [shape = 'u32[3]{0}', space=smem, size = 0xc, scoped, tag = 'DMA stride descriptor']
    #allocation6 [shape = 'u32[3]{0}', space=smem, size = 0xc, scoped, tag = 'DMA stride descriptor']
    %s8 = sshll.u32 1, 14
    %s9 = sxor.u32 4294967295, %s8
    %s11 = sshll.u32 %s0, 4
    %s12 = int_to_ptr.hbm [resolvable:$true] %s11
    %s13 = sshll.u32 %s2, 4
    %s14 = int_to_ptr.hbm [resolvable:$true] %s13
    %18 = sst [smem:[#allocation4]] 2048
    %s19 = scalar_lea.smem [#allocation4], 1
    %20 = sst [smem:[%s19]] 3072
    %s21 = scalar_lea.smem [#allocation4], 2
    %22 = sst [smem:[%s21]] 128
    %24 = dma.general %s12, 8192, %s14, [#allocation2], [#allocation3], [#allocation4], 0, 0
    %s25 = scalar_lea.hbm %s2, 128
    %s26 = scalar_lea.sflag [#allocation2], 1
    %s28 = sshll.u32 1, 14
    %s29 = sxor.u32 4294967295, %s28
    %s31 = sshll.u32 %s1, 4
    %s32 = int_to_ptr.hbm [resolvable:$true] %s31
    %s33 = sshll.u32 %s25, 4
    %s34 = int_to_ptr.hbm [resolvable:$true] %s33
    %38 = sst [smem:[#allocation6]] 1024
    %s39 = scalar_lea.smem [#allocation6], 1
    %40 = sst [smem:[%s39]] 3072
    %s41 = scalar_lea.smem [#allocation6], 2
    %42 = sst [smem:[%s41]] 64
    %44 = dma.general %s32, 4096, %s34, %s26, [#allocation5], [#allocation6], 0, 0
    %s45 = smul.u32 8, 4
    %s46 = smul.u32 %s45, 16
    %s47 = sshll.u32 %s46, 4
    %48 = dma.done [#allocation2], %s47
    %s49 = smul.u32 %s45, 8
    %s50 = sshll.u32 %s49, 4
    %51 = dma.done %s26, %s50
  %52 = vsyncmov [#allocation2]
  %s53 = vpop.sfrf %52
  %p54 = scmp.eq.s32.totalorder %s53, 0
  %p55 = pneg %p54
  %57 = shalt.err (%p55)
  %s58 = scalar_lea.sflag [#allocation2], 1
  %59 = vsyncmov %s58
  %s60 = vpop.sfrf %59
  %p61 = scmp.eq.s32.totalorder %s60, 0
  %p62 = pneg %p61
  %64 = shalt.err (%p62)

</llo_original>
